<compile_context>
chip_gen: v6e
topology: v6e:2x2x1
jax: 0.10.0
libtpu: 0.0.40
codegen_flags: <defaults>
</compile_context>

<pallas_src>
import math
import functools

import jax
import jax.numpy as jnp
from jax.experimental import pallas as pl
from jax.experimental.pallas import tpu as pltpu


def _round_up(v, m):
    return ((v + m - 1) // m) * m


def _lora_linear_kernel(x_ref, wt_ref, b_ref, at_ref, bt_ref, o_ref,
                        acc_ref, u_ref, *, scaling):
    # x_ref  : (tm, tk)   activation tile
    # wt_ref : (tk, tn)   W^T tile (pre-transposed in wrapper)
    # b_ref  : (1,  tn)   bias tile
    # at_ref : (tk, RP)   A^T tile (rank padded to RP)
    # bt_ref : (RP, tn)   B^T tile
    # o_ref  : (tm, tn)   output tile (written only at k == last)
    # acc_ref: (tm, tn)   f32 accumulator for x @ W^T
    # u_ref  : (tm, RP)   f32 accumulator for x @ A^T
    k = pl.program_id(2)

    @pl.when(k == 0)
    def _init():
        acc_ref[...] = jnp.zeros_like(acc_ref)
        u_ref[...] = jnp.zeros_like(u_ref)

    x = x_ref[...]
    # Base GEMM partial product (MXU, f32 accumulation).
    acc_ref[...] += jnp.dot(x, wt_ref[...], preferred_element_type=jnp.float32)
    # LoRA down-projection partial product (tiny rank dim, f32 accumulation).
    u_ref[...] += jnp.dot(x, at_ref[...], preferred_element_type=jnp.float32)

    @pl.when(k == pl.num_programs(2) - 1)
    def _finalize():
        # Scale the small (tm, RP) intermediate (cheap VPU work), then a single
        # rank-r up-projection per output tile, all in f32.
        lo = jnp.dot(u_ref[...] * scaling, bt_ref[...],
                     preferred_element_type=jnp.float32)
        out = acc_ref[...] + b_ref[...].astype(jnp.float32) + lo
        o_ref[...] = out.astype(o_ref.dtype)


def lora_linear(x, weight, bias, lora_A, lora_B, *, r=4, lora_alpha=1,
                tm_max=256, tn_max=256, tk_max=512):
    """x: (..., in_features) -> (..., out_features)."""
    out_features, in_features = weight.shape
    scaling = lora_alpha / r

    lead_shape = x.shape[:-1]
    x2d = x.reshape(-1, in_features)
    M, K, N = x2d.shape[0], in_features, out_features

    # Tile sizes: lane (128) / sublane (8) aligned, capped so double-buffered
    # tiles stay well inside scoped VMEM on every generation (incl. v7x).
    tm = min(tm_max, _round_up(M, 8))
    tn = min(tn_max, _round_up(N, 128))
    tk = min(tk_max, _round_up(K, 128))

    Mp, Np, Kp = _round_up(M, tm), _round_up(N, tn), _round_up(K, tk)
    RP = max(8, _round_up(r, 8))  # pad the LoRA rank to a sublane multiple

    # One-time wrapper-side transposes + zero padding (no in-kernel .T).
    xp = jnp.zeros((Mp, Kp), x2d.dtype).at[:M, :K].set(x2d)
    wt = jnp.zeros((Kp, Np), weight.dtype).at[:K, :N].set(weight.T)
    at = jnp.zeros((Kp, RP), lora_A.dtype).at[:K, :r].set(lora_A.T)
    bt = jnp.zeros((RP, Np), lora_B.dtype).at[:r, :N].set(lora_B.T)
    bp = jnp.zeros((1, Np), bias.dtype).at[0, :N].set(bias)

    nm, nn, nk = Mp // tm, Np // tn, Kp // tk

    kernel = functools.partial(_lora_linear_kernel, scaling=scaling)

    out_p = pl.pallas_call(
        kernel,
        out_shape=jax.ShapeDtypeStruct((Mp, Np), x.dtype),
        grid_spec=pltpu.PrefetchScalarGridSpec(
            num_scalar_prefetch=0,
            grid=(nm, nn, nk),
            in_specs=[
                pl.BlockSpec((tm, tk), lambda i, j, k: (i, k)),   # x
                pl.BlockSpec((tk, tn), lambda i, j, k: (k, j)),   # W^T (streamed)
                pl.BlockSpec((1, tn), lambda i, j, k: (0, j)),    # bias
                pl.BlockSpec((tk, RP), lambda i, j, k: (k, 0)),   # A^T (tiny)
                pl.BlockSpec((RP, tn), lambda i, j, k: (0, j)),   # B^T (tiny)
            ],
            out_specs=pl.BlockSpec((tm, tn), lambda i, j, k: (i, j)),
            scratch_shapes=[
                pltpu.VMEM((tm, tn), jnp.float32),   # base-GEMM accumulator
                pltpu.VMEM((tm, RP), jnp.float32),   # LoRA intermediate u
            ],
        ),
        compiler_params=pltpu.CompilerParams(
            dimension_semantics=("parallel", "parallel", "arbitrary"),
            vmem_limit_bytes=32 * 1024 * 1024,
        ),
    )(xp, wt, bp, at, bt)

    return out_p[:M, :N].reshape(*lead_shape, out_features)


if __name__ == "__main__":
    # Small shapes consistent with the module: batch=2, seq=8, hidden=32.
    batch, seq = 2, 8
    in_features, out_features = 32, 32
    r, lora_alpha = 4, 1

    key = jax.random.PRNGKey(0)
    kx, kw, kb, ka, kbb = jax.random.split(key, 5)

    x = jax.random.normal(kx, (batch, seq, in_features), dtype=jnp.float32)

    # Original nn.Linear params (kaiming-uniform-ish bounds, deterministic).
    w_bound = 1.0 / math.sqrt(in_features)
    weight = jax.random.uniform(kw, (out_features, in_features),
                                minval=-w_bound, maxval=w_bound,
                                dtype=jnp.float32)
    bias = jax.random.uniform(kb, (out_features,),
                              minval=-w_bound, maxval=w_bound,
                              dtype=jnp.float32)

    # lora_A: kaiming_uniform with a=sqrt(5) -> bound = sqrt(6/((1+a^2)*fan_in))
    a_bound = math.sqrt(6.0 / ((1.0 + 5.0) * in_features))
    lora_A = jax.random.uniform(ka, (r, in_features),
                                minval=-a_bound, maxval=a_bound,
                                dtype=jnp.float32)
    # Module inits lora_B to zeros; use small random values here so the LoRA
    # path is numerically exercised (deterministic, synthetic).
    lora_B = 0.01 * jax.random.normal(kbb, (out_features, r), dtype=jnp.float32)

    out = lora_linear(x, weight, bias, lora_A, lora_B,
                      r=r, lora_alpha=lora_alpha)
    out = jax.block_until_ready(out)

    # Pure-JAX reference check.
    scaling = lora_alpha / r
    ref = (x @ weight.T + bias) + ((x @ lora_A.T) @ lora_B.T) * scaling
    assert out.shape == (batch, seq, out_features)
    assert jnp.allclose(out, ref, atol=1e-5, rtol=1e-5)

    print("KERNEL_OK")
</pallas_src>

<mosaic_0001>
module attributes {stable_mosaic.version = 11 : i64} {
  func.func @_lora_linear_kernel(%arg0: i32, %arg1: i32, %arg2: i32, %arg3: memref<16x128xf32, #tpu.memory_space<vmem>>, %arg4: memref<128x128xf32, #tpu.memory_space<vmem>>, %arg5: memref<1x128xf32, #tpu.memory_space<vmem>>, %arg6: memref<128x8xf32, #tpu.memory_space<vmem>>, %arg7: memref<8x128xf32, #tpu.memory_space<vmem>>, %arg8: memref<16x128xf32, #tpu.memory_space<vmem>>, %arg9: memref<16x128xf32, #tpu.memory_space<vmem>>, %arg10: memref<16x8xf32, #tpu.memory_space<vmem>>) attributes {dimension_semantics = [#tpu.dimension_semantics<parallel>, #tpu.dimension_semantics<parallel>, #tpu.dimension_semantics<arbitrary>], iteration_bounds = array<i64: 1, 1, 1>, scalar_prefetch = 0 : i64, scratch_operands = 2 : i64, tpu.core_type = #tpu.core_type<tc>, window_params = [{transform_indices = @transform_0, window_bounds = array<i64: 16, 128>}, {transform_indices = @transform_1, window_bounds = array<i64: 128, 128>}, {transform_indices = @transform_2, window_bounds = array<i64: 1, 128>}, {transform_indices = @transform_3, window_bounds = array<i64: 128, 8>}, {transform_indices = @transform_4, window_bounds = array<i64: 8, 128>}, {transform_indices = @transform_5, window_bounds = array<i64: 16, 128>}]} {
    %c0_i32 = arith.constant 0 : i32
    %0 = arith.cmpi eq, %arg2, %c0_i32 : i32
    %1 = arith.extui %0 : i1 to i32
    %c0_i32_0 = arith.constant 0 : i32
    %2 = arith.cmpi ne, %1, %c0_i32_0 : i32
    scf.if %2 {
      %cst_17 = arith.constant 0.000000e+00 : f32
      %17 = vector.broadcast %cst_17 : f32 to vector<16x128xf32>
      %c0_18 = arith.constant 0 : index
      %c0_19 = arith.constant 0 : index
      %18 = vector.load %arg9[%c0_18, %c0_19] : memref<16x128xf32, #tpu.memory_space<vmem>>, vector<16x128xf32>
      tpu.vector_store %arg9[%c0_18, %c0_19], %17 {strides = array<i32>} : memref<16x128xf32, #tpu.memory_space<vmem>>, vector<16x128xf32>,
      %cst_20 = arith.constant 0.000000e+00 : f32
      %19 = vector.broadcast %cst_20 : f32 to vector<16x8xf32>
      %c0_21 = arith.constant 0 : index
      %c0_22 = arith.constant 0 : index
      %20 = vector.load %arg10[%c0_21, %c0_22] : memref<16x8xf32, #tpu.memory_space<vmem>>, vector<16x8xf32>
      tpu.vector_store %arg10[%c0_21, %c0_22], %19 {strides = array<i32>} : memref<16x8xf32, #tpu.memory_space<vmem>>, vector<16x8xf32>,
    } else {
    }
    %c0 = arith.constant 0 : index
    %c0_1 = arith.constant 0 : index
    %3 = vector.load %arg3[%c0, %c0_1] : memref<16x128xf32, #tpu.memory_space<vmem>>, vector<16x128xf32>
    %c0_2 = arith.constant 0 : index
    %c0_3 = arith.constant 0 : index
    %4 = vector.load %arg9[%c0_2, %c0_3] : memref<16x128xf32, #tpu.memory_space<vmem>>, vector<16x128xf32>
    %c0_4 = arith.constant 0 : index
    %c0_5 = arith.constant 0 : index
    %5 = vector.load %arg4[%c0_4, %c0_5] : memref<128x128xf32, #tpu.memory_space<vmem>>, vector<128x128xf32>
    %cst = arith.constant dense<0.000000e+00> : vector<16x128xf32>
    %6 = tpu.matmul %3, %5, %cst {dimension_numbers = #tpu.dot_dimension_numbers<[1], [0], [0], [1], [0, 0, 1, 1], [], []>} : vector<16x128xf32>, vector<128x128xf32>, vector<16x128xf32> -> vector<16x128xf32>
    %7 = arith.addf %4, %6 : vector<16x128xf32>
    %c0_6 = arith.constant 0 : index
    %c0_7 = arith.constant 0 : index
    %8 = vector.load %arg9[%c0_6, %c0_7] : memref<16x128xf32, #tpu.memory_space<vmem>>, vector<16x128xf32>
    tpu.vector_store %arg9[%c0_6, %c0_7], %7 {strides = array<i32>} : memref<16x128xf32, #tpu.memory_space<vmem>>, vector<16x128xf32>,
    %c0_8 = arith.constant 0 : index
    %c0_9 = arith.constant 0 : index
    %9 = vector.load %arg10[%c0_8, %c0_9] : memref<16x8xf32, #tpu.memory_space<vmem>>, vector<16x8xf32>
    %c0_10 = arith.constant 0 : index
    %c0_11 = arith.constant 0 : index
    %10 = vector.load %arg6[%c0_10, %c0_11] : memref<128x8xf32, #tpu.memory_space<vmem>>, vector<128x8xf32>
    %cst_12 = arith.constant dense<0.000000e+00> : vector<16x8xf32>
    %11 = tpu.matmul %3, %10, %cst_12 {dimension_numbers = #tpu.dot_dimension_numbers<[1], [0], [0], [1], [0, 0, 1, 1], [], []>} : vector<16x128xf32>, vector<128x8xf32>, vector<16x8xf32> -> vector<16x8xf32>
    %12 = arith.addf %9, %11 : vector<16x8xf32>
    %c0_13 = arith.constant 0 : index
    %c0_14 = arith.constant 0 : index
    %13 = vector.load %arg10[%c0_13, %c0_14] : memref<16x8xf32, #tpu.memory_space<vmem>>, vector<16x8xf32>
    tpu.vector_store %arg10[%c0_13, %c0_14], %12 {strides = array<i32>} : memref<16x8xf32, #tpu.memory_space<vmem>>, vector<16x8xf32>,
    %c0_i32_15 = arith.constant 0 : i32
    %14 = arith.cmpi eq, %arg2, %c0_i32_15 : i32
    %15 = arith.extui %14 : i1 to i32
    %c0_i32_16 = arith.constant 0 : i32
    %16 = arith.cmpi ne, %15, %c0_i32_16 : i32
    scf.if %16 {
      %c0_17 = arith.constant 0 : index
      %c0_18 = arith.constant 0 : index
      %17 = vector.load %arg10[%c0_17, %c0_18] : memref<16x8xf32, #tpu.memory_space<vmem>>, vector<16x8xf32>
      %cst_19 = arith.constant 2.500000e-01 : f32
      %18 = vector.broadcast %cst_19 : f32 to vector<16x8xf32>
      %19 = arith.mulf %17, %18 : vector<16x8xf32>
      %c0_20 = arith.constant 0 : index
      %c0_21 = arith.constant 0 : index
      %20 = vector.load %arg7[%c0_20, %c0_21] : memref<8x128xf32, #tpu.memory_space<vmem>>, vector<8x128xf32>
      %cst_22 = arith.constant dense<0.000000e+00> : vector<16x128xf32>
      %21 = tpu.matmul %19, %20, %cst_22 {dimension_numbers = #tpu.dot_dimension_numbers<[1], [0], [0], [1], [0, 0, 1, 1], [], []>} : vector<16x8xf32>, vector<8x128xf32>, vector<16x128xf32> -> vector<16x128xf32>
      %c0_23 = arith.constant 0 : index
      %c0_24 = arith.constant 0 : index
      %22 = vector.load %arg9[%c0_23, %c0_24] : memref<16x128xf32, #tpu.memory_space<vmem>>, vector<16x128xf32>
      %c0_25 = arith.constant 0 : index
      %c0_26 = arith.constant 0 : index
      %23 = vector.load %arg5[%c0_25, %c0_26] : memref<1x128xf32, #tpu.memory_space<vmem>>, vector<1x128xf32>
      %24 = vector.broadcast %23 : vector<1x128xf32> to vector<16x128xf32>
      %25 = arith.addf %22, %24 : vector<16x128xf32>
      %26 = arith.addf %25, %21 : vector<16x128xf32>
      %c0_27 = arith.constant 0 : index
      %c0_28 = arith.constant 0 : index
      %27 = vector.load %arg8[%c0_27, %c0_28] : memref<16x128xf32, #tpu.memory_space<vmem>>, vector<16x128xf32>
      tpu.vector_store %arg8[%c0_27, %c0_28], %26 {strides = array<i32>} : memref<16x128xf32, #tpu.memory_space<vmem>>, vector<16x128xf32>,
    } else {
    }
    return
  }
  func.func @transform_0(%arg0: i32, %arg1: i32, %arg2: i32) -> (i32, i32) {
    %c0_i32 = arith.constant 0 : i32
    return %arg0, %arg2 : i32, i32
  }
  func.func @transform_1(%arg0: i32, %arg1: i32, %arg2: i32) -> (i32, i32) {
    %c0_i32 = arith.constant 0 : i32
    return %arg2, %arg1 : i32, i32
  }
  func.func @transform_2(%arg0: i32, %arg1: i32, %arg2: i32) -> (i32, i32) {
    %c0_i32 = arith.constant 0 : i32
    %c0_i32_0 = arith.constant 0 : i32
    return %c0_i32, %arg1 : i32, i32
  }
  func.func @transform_3(%arg0: i32, %arg1: i32, %arg2: i32) -> (i32, i32) {
    %c0_i32 = arith.constant 0 : i32
    %c0_i32_0 = arith.constant 0 : i32
    return %arg2, %c0_i32 : i32, i32
  }
  func.func @transform_4(%arg0: i32, %arg1: i32, %arg2: i32) -> (i32, i32) {
    %c0_i32 = arith.constant 0 : i32
    %c0_i32_0 = arith.constant 0 : i32
    return %c0_i32, %arg1 : i32, i32
  }
  func.func @transform_5(%arg0: i32, %arg1: i32, %arg2: i32) -> (i32, i32) {
    %c0_i32 = arith.constant 0 : i32
    return %arg0, %arg1 : i32, i32
  }
}

</mosaic_0001>

<llo_original>
// kernel: tpu_custom_call.1
$region0: #{tpu_custom_call.1}
  #allocation0 [shape = 'u32[]', space=smem, size = 0x4, offset = 0x4, fixed_abs, tag = 'smem constant byte address 0x4 - core index']
  #allocation1 [shape = 'u32[144,128]{1,0:T(1,128)}', space=vmem, size = 0x12000, scoped, tag = 'internal scratch']
  #allocation2 [shape = 'f32[16,128]{1,0:T(8,128)}', space=vmem, size = 0x2000, scoped, tag = 'scratch operand']
  #allocation3 [shape = 'f32[16,8]{1,0:T(8,128)}', space=vmem, size = 0x2000, scoped, tag = 'scratch operand']
  %s0 = inlined_call_operand.hbm [shape: f32[16,128], index: 0, kind: input, shape index: {}]
  %s1 = inlined_call_operand.vmem [shape: f32[128,128], index: 1, kind: input, shape index: {}]
  %s2 = inlined_call_operand.vmem [shape: f32[1,128], index: 2, kind: input, shape index: {}]
  %s3 = inlined_call_operand.vmem [shape: f32[128,8], index: 3, kind: input, shape index: {}]
  %s4 = inlined_call_operand.vmem [shape: f32[8,128], index: 4, kind: input, shape index: {}]
  %s5 = inlined_call_operand.hbm [shape: f32[16,128], index: 5, kind: output, shape index: {}]
  %s6 = sld [smem:[#allocation0]]
  $region42: #{tpu_custom_call.1} parent=0
    _
  %s8 = ssub.s32 1, %s6
  %s9 = scalar_select 0, %s8, %s6
  $region1: #{tpu_custom_call.1} parent=0
    #allocation4 [shape = 'u8[8192]{0}', space=vmem, size = 0x2000, scoped, tag = 'input window, operand 0, single buffered']
    #allocation5 [shape = 's32[1]{0}', space=sflag, size = 0x4, scoped, tag = 'scoped memory for tpu_custom_call.1']
    #allocation6 [shape = 's32[1]{0}', space=sflag, size = 0x4, scoped, tag = 'scoped memory for tpu_custom_call.1']
    #allocation7 [shape = 'u8[8192]{0}', space=vmem, size = 0x2000, scoped, tag = 'output window, operand 0, single buffered']
    %10 = vsyncpa [#allocation5], 0
    %11 = vsyncpa [#allocation6], 0
    // Predicated region
    $region2: #{tpu_custom_call.1} parent=1 // pred_check
      _
    $region3: #{tpu_custom_call.1} parent=1 // pred_check_branch
      %13 = sbr.rel (0) target = $region5
    $region4: #{tpu_custom_call.1} parent=1 // pred_region
      %s15 = ssub.s32 256, 256
      %16 = vsyncadd [#allocation5], %s15
      %s17 = sshll.u32 [#allocation4], 4
      %s18 = int_to_ptr.vmem [resolvable:$true] %s17
      %23 = dma.hbm_to_vmem [thread:$0]  %s0, 256, %s18, [#allocation5], 128, 128, 8
    $region5: #{tpu_custom_call.1} parent=1 // pred_fallthru
      _
    // Predicated region
    $region6: #{tpu_custom_call.1} parent=1 // pred_check
      _
    $region7: #{tpu_custom_call.1} parent=1 // pred_check_branch
      %25 = sbr.rel (0) target = $region9
    $region8: #{tpu_custom_call.1} parent=1 // pred_region
      _
    $region9: #{tpu_custom_call.1} parent=1 // pred_fallthru
      _
    // Predicated region
    $region10: #{tpu_custom_call.1} parent=1 // pred_check
      _
    $region11: #{tpu_custom_call.1} parent=1 // pred_check_branch
      %27 = sbr.rel (0) target = $region13
    $region12: #{tpu_custom_call.1} parent=1 // pred_region
      _
    $region13: #{tpu_custom_call.1} parent=1 // pred_fallthru
      _
    // Predicated region
    $region14: #{tpu_custom_call.1} parent=1 // pred_check
      _
    $region15: #{tpu_custom_call.1} parent=1 // pred_check_branch
      %29 = sbr.rel (0) target = $region17
    $region16: #{tpu_custom_call.1} parent=1 // pred_region
      _
    $region17: #{tpu_custom_call.1} parent=1 // pred_fallthru
      _
    // Predicated region
    $region18: #{tpu_custom_call.1} parent=1 // pred_check
      _
    $region19: #{tpu_custom_call.1} parent=1 // pred_check_branch
      %31 = sbr.rel (0) target = $region21
    $region20: #{tpu_custom_call.1} parent=1 // pred_region
      _
    $region21: #{tpu_custom_call.1} parent=1 // pred_fallthru
      _
    // Predicated region
    $region22: #{tpu_custom_call.1} parent=1 // pred_check
      _
    $region23: #{tpu_custom_call.1} parent=1 // pred_check_branch
      %33 = sbr.rel (0) target = $region25
    $region24: #{tpu_custom_call.1} parent=1 // pred_region
      %34 = dma.done [#allocation5], 256
    $region25: #{tpu_custom_call.1} parent=1 // pred_fallthru
      _
    %p35 = scmp.eq.s32.totalorder 0, 0
    // Predicated region
    $region26: #{tpu_custom_call.1} parent=1 // pred_check
      %p36 = pneg %p35
    $region27: #{tpu_custom_call.1} parent=1 // pred_check_branch
      %38 = sbr.rel (%p36) target = $region29
    $region28: #{tpu_custom_call.1} parent=1 // pred_region
      %39 = vst [vmem:[#allocation2] sm:$0xff] 0.0
      %40 = vst [vmem:[#allocation2 + $0x8] sm:$0xff] 0.0
      %vm41 = vcmask 64512
      %42 = vst.msk [vmem:[#allocation3] sm:$0xff] %vm41, 0.0
      %43 = vst.msk [vmem:[#allocation3 + $0x8] sm:$0xff] %vm41, 0.0
    $region29: #{tpu_custom_call.1} parent=1 // pred_fallthru
      _
    %v44 = vld [vmem:[#allocation4] sm:$0xff]
    %v45 = vld [vmem:[#allocation4 + $0x8] sm:$0xff]
    %v46 = vld [vmem:[#allocation2] sm:$0xff]
    %v47 = vld [vmem:[#allocation2 + $0x8] sm:$0xff]
    %v48 = vld [vmem:[%s1] sm:$0xff]
    %v49 = vld [vmem:[%s1 + $0x8] sm:$0xff]
    %v50 = vld [vmem:[%s1 + $0x10] sm:$0xff]
    %v51 = vld [vmem:[%s1 + $0x18] sm:$0xff]
    %v52 = vld [vmem:[%s1 + $0x20] sm:$0xff]
    %v53 = vld [vmem:[%s1 + $0x28] sm:$0xff]
    %v54 = vld [vmem:[%s1 + $0x30] sm:$0xff]
    %v55 = vld [vmem:[%s1 + $0x38] sm:$0xff]
    %v56 = vld [vmem:[%s1 + $0x40] sm:$0xff]
    %v57 = vld [vmem:[%s1 + $0x48] sm:$0xff]
    %v58 = vld [vmem:[%s1 + $0x50] sm:$0xff]
    %v59 = vld [vmem:[%s1 + $0x58] sm:$0xff]
    %v60 = vld [vmem:[%s1 + $0x60] sm:$0xff]
    %v61 = vld [vmem:[%s1 + $0x68] sm:$0xff]
    %v62 = vld [vmem:[%s1 + $0x70] sm:$0xff]
    %v63 = vld [vmem:[%s1 + $0x78] sm:$0xff]
    %64 = vmatprep.subr.mxu0 0.0
    %65 = vmatpush1.msra.mxu0 %v63
    %66 = vmatprep.subr.mxu0 0.0
    %67 = vmatpush1.msra.mxu0 %v62
    %68 = vmatprep.subr.mxu0 0.0
    %69 = vmatpush1.msra.mxu0 %v61
    %70 = vmatprep.subr.mxu0 0.0
    %71 = vmatpush1.msra.mxu0 %v60
    %72 = vmatprep.subr.mxu0 0.0
    %73 = vmatpush1.msra.mxu0 %v59
    %74 = vmatprep.subr.mxu0 0.0
    %75 = vmatpush1.msra.mxu0 %v58
    %76 = vmatprep.subr.mxu0 0.0
    %77 = vmatpush1.msra.mxu0 %v57
    %78 = vmatprep.subr.mxu0 0.0
    %79 = vmatpush1.msra.mxu0 %v56
    %80 = vmatprep.subr.mxu0 0.0
    %81 = vmatpush1.msra.mxu0 %v55
    %82 = vmatprep.subr.mxu0 0.0
    %83 = vmatpush1.msra.mxu0 %v54
    %84 = vmatprep.subr.mxu0 0.0
    %85 = vmatpush1.msra.mxu0 %v53
    %86 = vmatprep.subr.mxu0 0.0
    %87 = vmatpush1.msra.mxu0 %v52
    %88 = vmatprep.subr.mxu0 0.0
    %89 = vmatpush1.msra.mxu0 %v51
    %90 = vmatprep.subr.mxu0 0.0
    %91 = vmatpush1.msra.mxu0 %v50
    %92 = vmatprep.subr.mxu0 0.0
    %93 = vmatpush1.msra.mxu0 %v49
    %94 = vmatprep.subr.mxu0 0.0
    %95 = vmatpush1.msra.mxu0 %v48
    %96 = vmatprep.subr.mxu0 0.0
    %97 = vmatpush2.msra.mxu0 0.0
    %98 = vmatprep.subr.mxu0 0.0
    %99 = vmatpush2.msra.mxu0 0.0
    %100 = vmatprep.subr.mxu0 0.0
    %101 = vmatpush2.msra.mxu0 0.0
    %102 = vmatprep.subr.mxu0 0.0
    %103 = vmatpush2.msra.mxu0 0.0
    %104 = vmatprep.subr.mxu0 0.0
    %105 = vmatpush2.msra.mxu0 0.0
    %106 = vmatprep.subr.mxu0 0.0
    %107 = vmatpush2.msra.mxu0 0.0
    %108 = vmatprep.subr.mxu0 0.0
    %109 = vmatpush2.msra.mxu0 0.0
    %110 = vmatprep.subr.mxu0 0.0
    %111 = vmatpush2.msra.mxu0 0.0
    %112 = vmatprep.subr.mxu0 0.0
    %113 = vmatpush2.msra.mxu0 0.0
    %114 = vmatprep.subr.mxu0 0.0
    %115 = vmatpush2.msra.mxu0 0.0
    %116 = vmatprep.subr.mxu0 0.0
    %117 = vmatpush2.msra.mxu0 0.0
    %118 = vmatprep.subr.mxu0 0.0
    %119 = vmatpush2.msra.mxu0 0.0
    %120 = vmatprep.subr.mxu0 0.0
    %121 = vmatpush2.msra.mxu0 0.0
    %122 = vmatprep.subr.mxu0 0.0
    %123 = vmatpush2.msra.mxu0 0.0
    %124 = vmatprep.subr.mxu0 0.0
    %125 = vmatpush2.msra.mxu0 0.0
    %126 = vmatprep.subr.mxu0 0.0
    %127 = vmatpush2.msra.mxu0 0.0
    %128 = vmatprep.mubr.f32.mxu0 0.0
    %129 = vmatmul.mubr.f32.gmra.mxu0 %v44
    %v130 = vpop.f32.mrf.mxu0
    %v131 = vadd.f32 0.0, %v130
    %v132 = vpop.f32.mrf.mxu0
    %133 = vmatprep.mubr.f32.mxu0 0.0
    %134 = vmatmul.mubr.f32.gmra.mxu0 %v45
    %v135 = vpop.f32.mrf.mxu0
    %v136 = vadd.f32 0.0, %v135
    %v137 = vpop.f32.mrf.mxu0
    %138 = vdwg.mxu0
    %v139 = vadd.f32 %v46, %v131
    %v140 = vadd.f32 %v47, %v136
    %141 = vst [vmem:[#allocation2] sm:$0xff] %v139
    %142 = vst [vmem:[#allocation2 + $0x8] sm:$0xff] %v140
    %v143 = vld [vmem:[#allocation3] sm:$0xff]
    %v144 = vld [vmem:[#allocation3 + $0x8] sm:$0xff]
    %v145 = vld [vmem:[%s3] sm:$0xff]
    %v146 = vld [vmem:[%s3 + $0x8] sm:$0xff]
    %v147 = vld [vmem:[%s3 + $0x10] sm:$0xff]
    %v148 = vld [vmem:[%s3 + $0x18] sm:$0xff]
    %v149 = vld [vmem:[%s3 + $0x20] sm:$0xff]
    %v150 = vld [vmem:[%s3 + $0x28] sm:$0xff]
    %v151 = vld [vmem:[%s3 + $0x30] sm:$0xff]
    %v152 = vld [vmem:[%s3 + $0x38] sm:$0xff]
    %v153 = vld [vmem:[%s3 + $0x40] sm:$0xff]
    %v154 = vld [vmem:[%s3 + $0x48] sm:$0xff]
    %v155 = vld [vmem:[%s3 + $0x50] sm:$0xff]
    %v156 = vld [vmem:[%s3 + $0x58] sm:$0xff]
    %v157 = vld [vmem:[%s3 + $0x60] sm:$0xff]
    %v158 = vld [vmem:[%s3 + $0x68] sm:$0xff]
    %v159 = vld [vmem:[%s3 + $0x70] sm:$0xff]
    %v160 = vld [vmem:[%s3 + $0x78] sm:$0xff]
    %161 = vmatprep.subr.mxu0 0.0
    %162 = vmatpush1.msra.mxu0 %v160
    %163 = vmatprep.subr.mxu0 0.0
    %164 = vmatpush1.msra.mxu0 %v159
    %165 = vmatprep.subr.mxu0 0.0
    %166 = vmatpush1.msra.mxu0 %v158
    %167 = vmatprep.subr.mxu0 0.0
    %168 = vmatpush1.msra.mxu0 %v157
    %169 = vmatprep.subr.mxu0 0.0
    %170 = vmatpush1.msra.mxu0 %v156
    %171 = vmatprep.subr.mxu0 0.0
    %172 = vmatpush1.msra.mxu0 %v155
    %173 = vmatprep.subr.mxu0 0.0
    %174 = vmatpush1.msra.mxu0 %v154
    %175 = vmatprep.subr.mxu0 0.0
    %176 = vmatpush1.msra.mxu0 %v153
    %177 = vmatprep.subr.mxu0 0.0
    %178 = vmatpush1.msra.mxu0 %v152
    %179 = vmatprep.subr.mxu0 0.0
    %180 = vmatpush1.msra.mxu0 %v151
    %181 = vmatprep.subr.mxu0 0.0
    %182 = vmatpush1.msra.mxu0 %v150
    %183 = vmatprep.subr.mxu0 0.0
    %184 = vmatpush1.msra.mxu0 %v149
    %185 = vmatprep.subr.mxu0 0.0
    %186 = vmatpush1.msra.mxu0 %v148
    %187 = vmatprep.subr.mxu0 0.0
    %188 = vmatpush1.msra.mxu0 %v147
    %189 = vmatprep.subr.mxu0 0.0
    %190 = vmatpush1.msra.mxu0 %v146
    %191 = vmatprep.subr.mxu0 0.0
    %192 = vmatpush1.msra.mxu0 %v145
    %193 = vmatprep.subr.mxu0 0.0
    %194 = vmatpush2.msra.mxu0 0.0
    %195 = vmatprep.subr.mxu0 0.0
    %196 = vmatpush2.msra.mxu0 0.0
    %197 = vmatprep.subr.mxu0 0.0
    %198 = vmatpush2.msra.mxu0 0.0
    %199 = vmatprep.subr.mxu0 0.0
    %200 = vmatpush2.msra.mxu0 0.0
    %201 = vmatprep.subr.mxu0 0.0
    %202 = vmatpush2.msra.mxu0 0.0
    %203 = vmatprep.subr.mxu0 0.0
    %204 = vmatpush2.msra.mxu0 0.0
    %205 = vmatprep.subr.mxu0 0.0
    %206 = vmatpush2.msra.mxu0 0.0
    %207 = vmatprep.subr.mxu0 0.0
    %208 = vmatpush2.msra.mxu0 0.0
    %209 = vmatprep.subr.mxu0 0.0
    %210 = vmatpush2.msra.mxu0 0.0
    %211 = vmatprep.subr.mxu0 0.0
    %212 = vmatpush2.msra.mxu0 0.0
    %213 = vmatprep.subr.mxu0 0.0
    %214 = vmatpush2.msra.mxu0 0.0
    %215 = vmatprep.subr.mxu0 0.0
    %216 = vmatpush2.msra.mxu0 0.0
    %217 = vmatprep.subr.mxu0 0.0
    %218 = vmatpush2.msra.mxu0 0.0
    %219 = vmatprep.subr.mxu0 0.0
    %220 = vmatpush2.msra.mxu0 0.0
    %221 = vmatprep.subr.mxu0 0.0
    %222 = vmatpush2.msra.mxu0 0.0
    %223 = vmatprep.subr.mxu0 0.0
    %224 = vmatpush2.msra.mxu0 0.0
    %225 = vmatprep.mubr.f32.mxu0 0.0
    %226 = vmatmul.mubr.f32.gmra.mxu0 %v44
    %v227 = vpop.f32.mrf.mxu0
    %v228 = vadd.f32 0.0, %v227
    %v229 = vpop.f32.mrf.mxu0
    %230 = vmatprep.mubr.f32.mxu0 0.0
    %231 = vmatmul.mubr.f32.gmra.mxu0 %v45
    %v232 = vpop.f32.mrf.mxu0
    %v233 = vadd.f32 0.0, %v232
    %v234 = vpop.f32.mrf.mxu0
    %235 = vdwg.mxu0
    %v236 = vadd.f32 %v143, %v228
    %v237 = vadd.f32 %v144, %v233
    %vm238 = vcmask 64512
    %239 = vst.msk [vmem:[#allocation3] sm:$0xff] %vm238, %v236
    %240 = vst.msk [vmem:[#allocation3 + $0x8] sm:$0xff] %vm238, %v237
    // Predicated region
    $region30: #{tpu_custom_call.1} parent=1 // pred_check
      %p241 = pneg %p35
    $region31: #{tpu_custom_call.1} parent=1 // pred_check_branch
      %243 = sbr.rel (%p241) target = $region33
    $region32: #{tpu_custom_call.1} parent=1 // pred_region
      %v244 = vld [vmem:[#allocation3] sm:$0xff]
      %v245 = vld [vmem:[#allocation3 + $0x8] sm:$0xff]
      %v246 = vmul.f32 %v244, 0.25
      %v247 = vmul.f32 %v245, 0.25
      %v248 = vld [vmem:[%s4] sm:$0xff]
      %v250 = vsel %vm238, %v246, 0
      %v253 = vsel %vm238, %v247, 0
      %255 = vmatprep.subr.mxu0 0.0
      %256 = vmatpush1.msra.mxu0 0.0
      %257 = vmatprep.subr.mxu0 0.0
      %258 = vmatpush1.msra.mxu0 0.0
      %259 = vmatprep.subr.mxu0 0.0
      %260 = vmatpush1.msra.mxu0 0.0
      %261 = vmatprep.subr.mxu0 0.0
      %262 = vmatpush1.msra.mxu0 0.0
      %263 = vmatprep.subr.mxu0 0.0
      %264 = vmatpush1.msra.mxu0 0.0
      %265 = vmatprep.subr.mxu0 0.0
      %266 = vmatpush1.msra.mxu0 0.0
      %267 = vmatprep.subr.mxu0 0.0
      %268 = vmatpush1.msra.mxu0 0.0
      %269 = vmatprep.subr.mxu0 0.0
      %270 = vmatpush1.msra.mxu0 0.0
      %271 = vmatprep.subr.mxu0 0.0
      %272 = vmatpush1.msra.mxu0 0.0
      %273 = vmatprep.subr.mxu0 0.0
      %274 = vmatpush1.msra.mxu0 0.0
      %275 = vmatprep.subr.mxu0 0.0
      %276 = vmatpush1.msra.mxu0 0.0
      %277 = vmatprep.subr.mxu0 0.0
      %278 = vmatpush1.msra.mxu0 0.0
      %279 = vmatprep.subr.mxu0 0.0
      %280 = vmatpush1.msra.mxu0 0.0
      %281 = vmatprep.subr.mxu0 0.0
      %282 = vmatpush1.msra.mxu0 0.0
      %283 = vmatprep.subr.mxu0 0.0
      %284 = vmatpush1.msra.mxu0 0.0
      %285 = vmatprep.subr.mxu0 0.0
      %286 = vmatpush1.msra.mxu0 %v248
      %287 = vmatprep.subr.mxu0 0.0
      %288 = vmatpush2.msra.mxu0 0.0
      %289 = vmatprep.subr.mxu0 0.0
      %290 = vmatpush2.msra.mxu0 0.0
      %291 = vmatprep.subr.mxu0 0.0
      %292 = vmatpush2.msra.mxu0 0.0
      %293 = vmatprep.subr.mxu0 0.0
      %294 = vmatpush2.msra.mxu0 0.0
      %295 = vmatprep.subr.mxu0 0.0
      %296 = vmatpush2.msra.mxu0 0.0
      %297 = vmatprep.subr.mxu0 0.0
      %298 = vmatpush2.msra.mxu0 0.0
      %299 = vmatprep.subr.mxu0 0.0
      %300 = vmatpush2.msra.mxu0 0.0
      %301 = vmatprep.subr.mxu0 0.0
      %302 = vmatpush2.msra.mxu0 0.0
      %303 = vmatprep.subr.mxu0 0.0
      %304 = vmatpush2.msra.mxu0 0.0
      %305 = vmatprep.subr.mxu0 0.0
      %306 = vmatpush2.msra.mxu0 0.0
      %307 = vmatprep.subr.mxu0 0.0
      %308 = vmatpush2.msra.mxu0 0.0
      %309 = vmatprep.subr.mxu0 0.0
      %310 = vmatpush2.msra.mxu0 0.0
      %311 = vmatprep.subr.mxu0 0.0
      %312 = vmatpush2.msra.mxu0 0.0
      %313 = vmatprep.subr.mxu0 0.0
      %314 = vmatpush2.msra.mxu0 0.0
      %315 = vmatprep.subr.mxu0 0.0
      %316 = vmatpush2.msra.mxu0 0.0
      %317 = vmatprep.subr.mxu0 0.0
      %318 = vmatpush2.msra.mxu0 0.0
      %319 = vmatprep.mubr.f32.mxu0 0.0
      %320 = vmatmul.mubr.f32.gmra.mxu0 %v250
      %v321 = vpop.f32.mrf.mxu0
      %v322 = vadd.f32 0.0, %v321
      %v323 = vpop.f32.mrf.mxu0
      %324 = vmatprep.mubr.f32.mxu0 0.0
      %325 = vmatmul.mubr.f32.gmra.mxu0 %v253
      %v326 = vpop.f32.mrf.mxu0
      %v327 = vadd.f32 0.0, %v326
      %v328 = vpop.f32.mrf.mxu0
      %329 = vdwg.mxu0
      %v330 = vld [vmem:[#allocation2] sm:$0xff]
      %v331 = vld [vmem:[#allocation2 + $0x8] sm:$0xff]
      %v332 = vld [vmem:[%s2] sm:$0x1]
      %v334 = vlaneseq
      %v335 = vshrl.u32 %v334, 7
      %v336 = vsub.s32 0, %v335
      %v337 = vrot.slane %v332, %v336
      %v339 = vadd.f32 %v330, %v337
      %v340 = vadd.f32 %v331, %v337
      %v341 = vadd.f32 %v339, %v322
      %v342 = vadd.f32 %v340, %v327
      %343 = vst [vmem:[#allocation7] sm:$0xff] %v341
      %344 = vst [vmem:[#allocation7 + $0x8] sm:$0xff] %v342
    $region33: #{tpu_custom_call.1} parent=1 // pred_fallthru
      _
    // Predicated region
    $region34: #{tpu_custom_call.1} parent=1 // pred_check
      _
    $region35: #{tpu_custom_call.1} parent=1 // pred_check_branch
      %346 = sbr.rel (0) target = $region37
    $region36: #{tpu_custom_call.1} parent=1 // pred_region
      %s348 = ssub.s32 256, 256
      %349 = vsyncadd [#allocation6], %s348
      %s350 = sshll.u32 [#allocation7], 4
      %s351 = int_to_ptr.vmem [resolvable:$true] %s350
      %356 = dma.vmem_to_hbm [thread:$0]  %s351, 256, %s5, [#allocation6], 128, 128, 8
    $region37: #{tpu_custom_call.1} parent=1 // pred_fallthru
      _
    // Predicated region
    $region38: #{tpu_custom_call.1} parent=1 // pred_check
      _
    $region39: #{tpu_custom_call.1} parent=1 // pred_check_branch
      %358 = sbr.rel (0) target = $region41
    $region40: #{tpu_custom_call.1} parent=1 // pred_region
      %359 = dma.done [#allocation6], 256
    $region41: #{tpu_custom_call.1} parent=1 // pred_fallthru
      _
    %360 = vsyncpa [#allocation5], 1
    %361 = vsyncpa [#allocation6], 1

</llo_original>
